<compile_context>
chip_gen: v5e
topology: v5e:2x2
jax: 0.10.0
libtpu: 0.0.40
codegen_flags: <defaults>
</compile_context>

<pallas_src>
import functools
import math

import jax
import jax.numpy as jnp
from jax.experimental import pallas as pl
from jax.experimental.pallas import tpu as pltpu


# ----------------------------------------------------------------------------- kernel
def _ln_kernel(*refs, eps, use_scale, use_bias, inv_k, reduce_axis):
    """Normalize refs[0] along `reduce_axis` of the block.

    refs = (x_ref, [w_ref], [b_ref], o_ref).  Weight/bias blocks already have
    broadcast-compatible shapes (size-1 on every non-reduced axis)."""
    x_ref = refs[0]
    o_ref = refs[-1]
    i = 1

    x = x_ref[...].astype(jnp.float32)                          # f32 accumulation
    mean = jnp.sum(x, axis=reduce_axis, keepdims=True) * inv_k
    center = x - mean                                           # only `center` kept live
    # two-pass (centered) biased variance: matches the torch formula, better precision
    var = jnp.sum(center * center, axis=reduce_axis, keepdims=True) * inv_k
    inv = jax.lax.rsqrt(var + eps)                              # EUP rsqrt
    y = center * inv
    if use_scale:
        y = y * refs[i][...].astype(jnp.float32)
        i += 1
    if use_bias:
        y = y + refs[i][...].astype(jnp.float32)
    o_ref[...] = y.astype(o_ref.dtype)
    # TODO(synk): on v7x with bf16 I/O the scale/bias epilogue could run in bf16 to
    # halve VALU slots; kept in f32 until a bundle profile shows VALU saturation.


# --------------------------------------------------------------- generation-aware sizing
_WORKING_BYTES_PER_ELEM = 16          # f32 temporaries (x, center, square, y) margin
_FIXED_MARGIN = 2 << 20               # misc scratch / compiler internals


def _vmem_capacity_bytes():
    try:
        cap = getattr(pltpu.get_tpu_info(), "vmem_capacity_bytes", None)
        if cap:
            return int(cap)
    except Exception:
        pass
    return 64 << 20                    # conservative fallback (v7x per-TC VMEM)


def _budgets():
    """(target HBM traffic per grid step [bytes], vmem_limit ceiling [bytes])."""
    cap = _vmem_capacity_bytes()
    if cap >= (96 << 20):              # v5e / v6e: 128 MiB physical VMEM
        return 8 << 20, 96 << 20
    return 10 << 20, 48 << 20          # v7x: only 64 MiB VMEM but 3.2 TB/s HBM


def _elem_budget(in_size, out_size):
    """Max block elements: hit the per-step traffic target while keeping
    2x in + 2x out double-buffers + f32 working set under the VMEM ceiling."""
    traffic_target, ceiling = _budgets()
    per_elem_vmem = 2 * in_size + 2 * out_size + _WORKING_BYTES_PER_ELEM
    by_traffic = traffic_target // (in_size + out_size)
    by_vmem = int((ceiling * 0.9 - _FIXED_MARGIN) // per_elem_vmem)
    return max(1, min(by_traffic, by_vmem))


def _compiler_params(n_elems, in_size, out_size, semantics):
    _, ceiling = _budgets()
    need = n_elems * (2 * in_size + 2 * out_size + _WORKING_BYTES_PER_ELEM) + _FIXED_MARGIN
    return pltpu.CompilerParams(
        dimension_semantics=semantics,
        vmem_limit_bytes=int(min(max(need, 16 << 20), ceiling)),
    )


def _round_down(v, m):
    return (v // m) * m


def _round_up(v, m):
    return ((v + m - 1) // m) * m


def _pick_row_tile(r, k, in_size, out_size):
    """Row tile for the (R, K) lane-reduction layout (multiple of sublane pack)."""
    pack = max(8, 32 // max(in_size, 1))            # 8 f32 / 16 bf16 / 32 int8
    if r <= pack:
        return int(r)                               # full-extent block (legal)
    budget = _elem_budget(in_size, out_size)
    tr = min(r, max(pack, budget // max(k, 1)))
    # keep >= 4 grid steps (v7x has 2 TCs) if each step would still move >= ~1 MiB
    quarter = _round_up((r + 3) // 4, pack)
    if quarter * k * (in_size + out_size) >= (1 << 20):
        tr = min(tr, quarter)
    return int(max(pack, _round_down(tr, pack)))


def _pick_middle_tiles(p_, k, s, in_size, out_size):
    """(p_tile, lane_tile) for the (P, K, S) sublane-reduction layout."""
    budget = _elem_budget(in_size, out_size)
    if s <= 128:
        ts = int(s)                                 # full-extent last dim (legal)
    else:
        ts = min(_round_down(s, 128),
                 max(128, _round_down(budget // max(k, 1), 128)))
    pt = max(1, min(p_, budget // max(k * ts, 1)))

    def _steps(ptile):
        return ((p_ + ptile - 1) // ptile) * ((s + ts - 1) // ts)

    # keep >= 4 grid steps if each step would still move >= ~1 MiB (v7x: 2 TCs)
    while pt > 1 and _steps(pt) < 4 and \
            (pt // 2) * k * ts * (in_size + out_size) >= (1 << 20):
        pt //= 2
    return int(pt), int(ts)


# ---------------------------------------------------------------------------- helpers
def _flatten_affine(param, x_shape, dims):
    """Flatten weight/bias (torch-broadcasting against x, varying only over the
    normalized dims) into a length-K vector ordered by ascending normalized dim."""
    nd = len(x_shape)
    p = jnp.asarray(param)
    pshape = (1,) * (nd - p.ndim) + tuple(p.shape)
    p = p.reshape(pshape)
    other = tuple(ax for ax in range(nd) if ax not in dims)
    for ax in other:
        if pshape[ax] != 1:
            raise NotImplementedError(
                "_LayerNormGeneral affine param varying over non-normalized dims")
    if other:
        p = jnp.squeeze(p, axis=other)
    red_shape = tuple(x_shape[d] for d in dims)
    p = jnp.broadcast_to(p, red_shape)
    return p.reshape(-1)


# --------------------------------------------------------------------------- launchers
def _ln_trailing_2d(x2, wvec, bvec, eps, use_scale, use_bias, out_dtype):
    """Normalize over the LAST (lane) axis of a (rows, K) slab."""
    r, k = x2.shape
    in_size = x2.dtype.itemsize
    out_size = jnp.dtype(out_dtype).itemsize
    tr = _pick_row_tile(r, k, in_size, out_size)
    grid = (pl.cdiv(r, tr),)
    kernel = functools.partial(_ln_kernel, eps=eps, use_scale=use_scale,
                               use_bias=use_bias, inv_k=1.0 / k, reduce_axis=1)
    inputs = [x2]
    in_specs = [pl.BlockSpec((tr, k), lambda i: (i, 0))]
    if use_scale:
        inputs.append(wvec.reshape(1, k))
        in_specs.append(pl.BlockSpec((1, k), lambda i: (0, 0)))
    if use_bias:
        inputs.append(bvec.reshape(1, k))
        in_specs.append(pl.BlockSpec((1, k), lambda i: (0, 0)))
    # TODO(synk): K < 128 leaves lane-sparse (masked) stores; lane-packing
    # (rows,K)->(rows/g, g*K) would need an in-kernel lane-split reshape that Mosaic
    # does not reliably lower, so it is intentionally not attempted here.
    return pl.pallas_call(
        kernel,
        out_shape=jax.ShapeDtypeStruct((r, k), out_dtype),
        grid_spec=pltpu.PrefetchScalarGridSpec(
            num_scalar_prefetch=0,
            grid=grid,
            in_specs=in_specs,
            out_specs=pl.BlockSpec((tr, k), lambda i: (i, 0)),
        ),
        compiler_params=_compiler_params(tr * k, in_size, out_size, ("parallel",)),
    )(*inputs)


def _ln_middle_3d(x3, wvec, bvec, eps, use_scale, use_bias, out_dtype):
    """Normalize over the MIDDLE (sublane) axis of a (P, K, S) slab.

    NCHW channel-norm path: the big spatial dim S stays on lanes (lane-dense,
    unmasked stores), channels K on sublanes, and the leading P axis is also
    tiled so each grid step still moves several MB.  No transposes anywhere."""
    p_, k, s = x3.shape
    in_size = x3.dtype.itemsize
    out_size = jnp.dtype(out_dtype).itemsize
    pt, ts = _pick_middle_tiles(p_, k, s, in_size, out_size)
    grid = (pl.cdiv(p_, pt), pl.cdiv(s, ts))
    kernel = functools.partial(_ln_kernel, eps=eps, use_scale=use_scale,
                               use_bias=use_bias, inv_k=1.0 / k, reduce_axis=1)
    inputs = [x3]
    in_specs = [pl.BlockSpec((pt, k, ts), lambda i, j: (i, 0, j))]
    if use_scale:
        inputs.append(wvec.reshape(1, k, 1))
        in_specs.append(pl.BlockSpec((1, k, 1), lambda i, j: (0, 0, 0)))
    if use_bias:
        inputs.append(bvec.reshape(1, k, 1))
        in_specs.append(pl.BlockSpec((1, k, 1), lambda i, j: (0, 0, 0)))
    # TODO(synk): for shapes that force tiny tiles, pipeline_mode=pl.Buffered(3) on
    # the x BlockSpec would hide exposed DMA-issue latency; bigger tiles are used
    # instead so the default double buffer suffices.
    return pl.pallas_call(
        kernel,
        out_shape=jax.ShapeDtypeStruct((p_, k, s), out_dtype),
        grid_spec=pltpu.PrefetchScalarGridSpec(
            num_scalar_prefetch=0,
            grid=grid,
            in_specs=in_specs,
            out_specs=pl.BlockSpec((pt, k, ts), lambda i, j: (i, 0, j)),
        ),
        compiler_params=_compiler_params(pt * k * ts, in_size, out_size,
                                         ("parallel", "parallel")),
    )(*inputs)


# ----------------------------------------------------------------------------- wrapper
def layer_norm_general_pallas(x, weight=None, bias=None, *, normalized_dim=(-1,),
                              eps=1e-5, use_scale=True, use_bias=True):
    nd = x.ndim
    dims = tuple(sorted(d % nd for d in normalized_dim))
    k = int(math.prod(x.shape[d] for d in dims))

    wvec = _flatten_affine(weight, x.shape, dims) if use_scale else None
    bvec = _flatten_affine(bias, x.shape, dims) if use_bias else None

    contiguous = all(dims[i] + 1 == dims[i + 1] for i in range(len(dims) - 1))

    if contiguous and dims[-1] == nd - 1:
        # trailing-axis norm: (rows, K) view (free reshape), reduce over lanes.
        rows = int(math.prod(x.shape[:dims[0]]))
        out2 = _ln_trailing_2d(x.reshape(rows, k), wvec, bvec, eps,
                               use_scale, use_bias, x.dtype)
        return out2.reshape(x.shape)

    if contiguous:
        # middle-axis norm (e.g. NCHW channel norm): (P, K, S) view (free reshape),
        # reduce over sublanes, spatial dim stays lane-dense.
        p_ = int(math.prod(x.shape[:dims[0]]))
        s = int(math.prod(x.shape[dims[-1] + 1:]))
        out3 = _ln_middle_3d(x.reshape(p_, k, s), wvec, bvec, eps,
                             use_scale, use_bias, x.dtype)
        return out3.reshape(x.shape)

    # TODO(synk): non-contiguous normalized_dim has no transpose-free layout; fall
    # back to an explicit transpose (extra HBM traffic) + the trailing-axis kernel.
    other = tuple(d for d in range(nd) if d not in dims)
    perm = other + dims
    xt = jnp.transpose(x, perm)
    rows = int(math.prod(xt.shape[:len(other)]))
    out2 = _ln_trailing_2d(xt.reshape(rows, k), wvec, bvec, eps,
                           use_scale, use_bias, x.dtype).reshape(xt.shape)
    inv_perm = [0] * nd
    for pos, ax in enumerate(perm):
        inv_perm[ax] = pos
    return jnp.transpose(out2, tuple(inv_perm))


class LayerNormGeneralPallas:
    """Pallas port of _LayerNormGeneral.  Parameters are created deterministically."""

    def __init__(self, normalized_shape, normalized_dim=(-1,), scale=True, bias=True,
                 eps=1e-5, dtype=jnp.float32):
        self.normalized_dim = normalized_dim
        self.use_scale = scale
        self.use_bias = bias
        self.eps = eps
        n = int(math.prod(normalized_shape))
        # deterministic, non-trivial init (torch would use ones / zeros)
        self.weight = (1.0 + 0.1 * jnp.arange(n, dtype=dtype)).reshape(normalized_shape) if scale else None
        self.bias = (0.01 * jnp.arange(n, dtype=dtype)).reshape(normalized_shape) if bias else None

    def __call__(self, x):
        return layer_norm_general_pallas(
            x, self.weight, self.bias,
            normalized_dim=self.normalized_dim, eps=self.eps,
            use_scale=self.use_scale, use_bias=self.use_bias)


def _reference(x, weight, bias, normalized_dim, eps, use_scale, use_bias):
    center = x - jnp.mean(x, axis=normalized_dim, keepdims=True)
    var = jnp.mean(center * center, axis=normalized_dim, keepdims=True)
    y = center / jnp.sqrt(var + eps)
    if use_scale:
        y = y * weight
    if use_bias:
        y = y + bias
    return y


if __name__ == "__main__":
    # ---- channel-norm config (NCHW, normalized_dim=(1,), weight shape (C,1,1)) ----
    B, C, H, W = 2, 4, 16, 16
    x = jax.random.normal(jax.random.PRNGKey(0), (B, C, H, W), dtype=jnp.float32)
    layer = LayerNormGeneralPallas(normalized_shape=(C, 1, 1), normalized_dim=(1,),
                                   scale=True, bias=True, eps=1e-5)
    out = jax.block_until_ready(layer(x))
    ref = _reference(x, layer.weight, layer.bias, (1,), 1e-5, True, True)
    assert out.shape == x.shape and out.dtype == x.dtype
    assert jnp.allclose(out, ref, atol=1e-5, rtol=1e-5), "channel-norm mismatch"

    # ---- trailing-axis config (classic layernorm, normalized_dim=(-1,), no bias) ----
    Bs, S, D = 2, 8, 32
    x2 = jax.random.normal(jax.random.PRNGKey(1), (Bs, S, D), dtype=jnp.float32)
    layer2 = LayerNormGeneralPallas(normalized_shape=(D,), normalized_dim=(-1,),
                                    scale=True, bias=False, eps=1e-6)
    out2 = jax.block_until_ready(layer2(x2))
    ref2 = _reference(x2, layer2.weight, None, (-1,), 1e-6, True, False)
    assert out2.shape == x2.shape and out2.dtype == x2.dtype
    assert jnp.allclose(out2, ref2, atol=1e-5, rtol=1e-5), "last-axis mismatch"

    # ---- odd shapes: exercise remainder tiles / P-axis tiling on both paths ----
    x3 = jax.random.normal(jax.random.PRNGKey(2), (3, 37, 64), dtype=jnp.float32)
    layer3 = LayerNormGeneralPallas(normalized_shape=(64,), normalized_dim=(-1,),
                                    scale=True, bias=True, eps=1e-5)
    out3 = jax.block_until_ready(layer3(x3))
    ref3 = _reference(x3, layer3.weight, layer3.bias, (-1,), 1e-5, True, True)
    assert jnp.allclose(out3, ref3, atol=1e-5, rtol=1e-5), "odd last-axis mismatch"

    x4 = jax.random.normal(jax.random.PRNGKey(3), (2, 6, 10, 20), dtype=jnp.float32)
    layer4 = LayerNormGeneralPallas(normalized_shape=(6, 1, 1), normalized_dim=(1,),
                                    scale=True, bias=True, eps=1e-5)
    out4 = jax.block_until_ready(layer4(x4))
    ref4 = _reference(x4, layer4.weight, layer4.bias, (1,), 1e-5, True, True)
    assert jnp.allclose(out4, ref4, atol=1e-5, rtol=1e-5), "odd channel-norm mismatch"

    print("KERNEL_OK")
</pallas_src>

<mosaic_0001>
module attributes {stable_mosaic.version = 11 : i64} {
  func.func @_ln_kernel(%arg0: i32, %arg1: i32, %arg2: memref<2x4x256xf32, #tpu.memory_space<vmem>>, %arg3: memref<1x4x1xf32, #tpu.memory_space<vmem>>, %arg4: memref<1x4x1xf32, #tpu.memory_space<vmem>>, %arg5: memref<2x4x256xf32, #tpu.memory_space<vmem>>) attributes {dimension_semantics = [#tpu.dimension_semantics<parallel>, #tpu.dimension_semantics<parallel>], iteration_bounds = array<i64: 1, 1>, scalar_prefetch = 0 : i64, scratch_operands = 0 : i64, tpu.core_type = #tpu.core_type<tc>, window_params = [{transform_indices = @transform_0, window_bounds = array<i64: 2, 4, 256>}, {pipeline_mode = #tpu.pipeline_mode<synchronous>, transform_indices = @transform_1, window_bounds = array<i64: 1, 4, 1>}, {pipeline_mode = #tpu.pipeline_mode<synchronous>, transform_indices = @transform_2, window_bounds = array<i64: 1, 4, 1>}, {transform_indices = @transform_3, window_bounds = array<i64: 2, 4, 256>}]} {
    %c0 = arith.constant 0 : index
    %c0_0 = arith.constant 0 : index
    %c0_1 = arith.constant 0 : index
    %0 = vector.load %arg2[%c0, %c0_0, %c0_1] : memref<2x4x256xf32, #tpu.memory_space<vmem>>, vector<2x4x256xf32>
    %cst = arith.constant dense<0.000000e+00> : vector<2x256xf32>
    %1 = vector.multi_reduction <add>, %0, %cst [1] : vector<2x4x256xf32> to vector<2x256xf32>
    %2 = vector.shape_cast %1 : vector<2x256xf32> to vector<2x1x256xf32>
    %cst_2 = arith.constant 2.500000e-01 : f32
    %3 = vector.broadcast %cst_2 : f32 to vector<2x1x256xf32>
    %4 = arith.mulf %2, %3 : vector<2x1x256xf32>
    %5 = vector.broadcast %4 : vector<2x1x256xf32> to vector<2x4x256xf32>
    %6 = arith.subf %0, %5 : vector<2x4x256xf32>
    %7 = arith.mulf %6, %6 : vector<2x4x256xf32>
    %cst_3 = arith.constant dense<0.000000e+00> : vector<2x256xf32>
    %8 = vector.multi_reduction <add>, %7, %cst_3 [1] : vector<2x4x256xf32> to vector<2x256xf32>
    %9 = vector.shape_cast %8 : vector<2x256xf32> to vector<2x1x256xf32>
    %cst_4 = arith.constant 2.500000e-01 : f32
    %10 = vector.broadcast %cst_4 : f32 to vector<2x1x256xf32>
    %11 = arith.mulf %9, %10 : vector<2x1x256xf32>
    %cst_5 = arith.constant 9.99999974E-6 : f32
    %12 = vector.broadcast %cst_5 : f32 to vector<2x1x256xf32>
    %13 = arith.addf %11, %12 : vector<2x1x256xf32>
    %14 = math.rsqrt %13 : vector<2x1x256xf32>
    %15 = vector.broadcast %14 : vector<2x1x256xf32> to vector<2x4x256xf32>
    %16 = arith.mulf %6, %15 : vector<2x4x256xf32>
    %c0_6 = arith.constant 0 : index
    %c0_7 = arith.constant 0 : index
    %c0_8 = arith.constant 0 : index
    %17 = vector.load %arg3[%c0_6, %c0_7, %c0_8] : memref<1x4x1xf32, #tpu.memory_space<vmem>>, vector<1x4x1xf32>
    %18 = vector.broadcast %17 : vector<1x4x1xf32> to vector<2x4x256xf32>
    %19 = arith.mulf %16, %18 : vector<2x4x256xf32>
    %c0_9 = arith.constant 0 : index
    %c0_10 = arith.constant 0 : index
    %c0_11 = arith.constant 0 : index
    %20 = vector.load %arg4[%c0_9, %c0_10, %c0_11] : memref<1x4x1xf32, #tpu.memory_space<vmem>>, vector<1x4x1xf32>
    %21 = vector.broadcast %20 : vector<1x4x1xf32> to vector<2x4x256xf32>
    %22 = arith.addf %19, %21 : vector<2x4x256xf32>
    %c0_12 = arith.constant 0 : index
    %c0_13 = arith.constant 0 : index
    %c0_14 = arith.constant 0 : index
    %23 = vector.load %arg5[%c0_12, %c0_13, %c0_14] : memref<2x4x256xf32, #tpu.memory_space<vmem>>, vector<2x4x256xf32>
    tpu.vector_store %arg5[%c0_12, %c0_13, %c0_14], %22 {strides = array<i32>} : memref<2x4x256xf32, #tpu.memory_space<vmem>>, vector<2x4x256xf32>,
    return
  }
  func.func @transform_0(%arg0: i32, %arg1: i32) -> (i32, i32, i32) {
    %c0_i32 = arith.constant 0 : i32
    %c0_i32_0 = arith.constant 0 : i32
    return %arg0, %c0_i32, %arg1 : i32, i32, i32
  }
  func.func @transform_1(%arg0: i32, %arg1: i32) -> (i32, i32, i32) {
    %c0_i32 = arith.constant 0 : i32
    %c0_i32_0 = arith.constant 0 : i32
    %c0_i32_1 = arith.constant 0 : i32
    %c0_i32_2 = arith.constant 0 : i32
    return %c0_i32, %c0_i32_0, %c0_i32_1 : i32, i32, i32
  }
  func.func @transform_2(%arg0: i32, %arg1: i32) -> (i32, i32, i32) {
    %c0_i32 = arith.constant 0 : i32
    %c0_i32_0 = arith.constant 0 : i32
    %c0_i32_1 = arith.constant 0 : i32
    %c0_i32_2 = arith.constant 0 : i32
    return %c0_i32, %c0_i32_0, %c0_i32_1 : i32, i32, i32
  }
  func.func @transform_3(%arg0: i32, %arg1: i32) -> (i32, i32, i32) {
    %c0_i32 = arith.constant 0 : i32
    %c0_i32_0 = arith.constant 0 : i32
    return %arg0, %c0_i32, %arg1 : i32, i32, i32
  }
}

</mosaic_0001>

<llo_original>
// kernel: tpu_custom_call.1
$region0: #{tpu_custom_call.1}
  #allocation0 [shape = 'u32[]', space=smem, size = 0x4, offset = 0x4, fixed_abs, tag = 'smem constant byte address 0x4 - core index']
  #allocation1 [shape = 'u32[72,128]{1,0:T(1,128)}', space=vmem, size = 0x9000, scoped, tag = 'internal scratch']
  %s0 = inlined_call_operand.hbm [shape: f32[2,4,256], index: 0, kind: input, shape index: {}]
  %s1 = inlined_call_operand.vmem [shape: f32[1,4,1], index: 1, kind: input, shape index: {}]
  %s2 = inlined_call_operand.vmem [shape: f32[1,4,1], index: 2, kind: input, shape index: {}]
  %s3 = inlined_call_operand.hbm [shape: f32[2,4,256], index: 3, kind: output, shape index: {}]
  %s4 = sld [smem:[#allocation0]]
  $region26: #{tpu_custom_call.1} parent=0
    _
  %s6 = ssub.s32 1, %s4
  %s7 = scalar_select 0, %s6, %s4
  $region1: #{tpu_custom_call.1} parent=0
    #allocation2 [shape = 'u8[8192]{0}', space=vmem, size = 0x2000, scoped, tag = 'input window, operand 0, single buffered']
    #allocation3 [shape = 's32[1]{0}', space=sflag, size = 0x4, scoped, tag = 'scoped memory for tpu_custom_call.1']
    #allocation4 [shape = 's32[1]{0}', space=sflag, size = 0x4, scoped, tag = 'scoped memory for tpu_custom_call.1']
    #allocation5 [shape = 'u8[8192]{0}', space=vmem, size = 0x2000, scoped, tag = 'output window, operand 0, single buffered']
    %8 = vsyncpa [#allocation3], 0
    %9 = vsyncpa [#allocation4], 0
    // Predicated region
    $region2: #{tpu_custom_call.1} parent=1 // pred_check
      _
    $region3: #{tpu_custom_call.1} parent=1 // pred_check_branch
      %11 = sbr.rel (0) target = $region5
    $region4: #{tpu_custom_call.1} parent=1 // pred_region
      %13 = vsyncadd [#allocation3], 0
      %s14 = sshll.u32 %s0, 4
      %s15 = int_to_ptr.hbm [resolvable:$true] %s14
      %s16 = sshll.u32 [#allocation2], 4
      %s17 = int_to_ptr.vmem [resolvable:$true] %s16
      %22 = dma.hbm_to_vmem [thread:$0]  %s15, 256, %s17, [#allocation3], 128, 128, 8
    $region5: #{tpu_custom_call.1} parent=1 // pred_fallthru
      _
    // Predicated region
    $region6: #{tpu_custom_call.1} parent=1 // pred_check
      _
    $region7: #{tpu_custom_call.1} parent=1 // pred_check_branch
      %24 = sbr.rel (0) target = $region9
    $region8: #{tpu_custom_call.1} parent=1 // pred_region
      _
    $region9: #{tpu_custom_call.1} parent=1 // pred_fallthru
      _
    // Predicated region
    $region10: #{tpu_custom_call.1} parent=1 // pred_check
      _
    $region11: #{tpu_custom_call.1} parent=1 // pred_check_branch
      %26 = sbr.rel (0) target = $region13
    $region12: #{tpu_custom_call.1} parent=1 // pred_region
      _
    $region13: #{tpu_custom_call.1} parent=1 // pred_fallthru
      _
    // Predicated region
    $region14: #{tpu_custom_call.1} parent=1 // pred_check
      _
    $region15: #{tpu_custom_call.1} parent=1 // pred_check_branch
      %28 = sbr.rel (0) target = $region17
    $region16: #{tpu_custom_call.1} parent=1 // pred_region
      %30 = dma.done [#allocation3], 256
    $region17: #{tpu_custom_call.1} parent=1 // pred_fallthru
      _
    %v31 = vld [vmem:[#allocation2] sm:$0xff]
    %v32 = vld [vmem:[#allocation2 + $0x8] sm:$0xff]
    %35 = vst [vmem:[#allocation1] ss:$2 sm:$0xff] %v31
    %v36 = vld.sshfl [vmem:[#allocation1] sm:$0xff pattern:$0x75316420]
    %v37 = vld.sshfl [vmem:[#allocation1 + $0x8] sm:$0xff pattern:$0x75316420]
    %s38 = scalar_lea.vmem [#allocation1], 16
    %39 = vst [vmem:[%s38] ss:$2 sm:$0xff] %v32
    %v40 = vld.sshfl [vmem:[#allocation1 + $0x10] sm:$0xff pattern:$0x75316420]
    %v41 = vld.sshfl [vmem:[#allocation1 + $0x18] sm:$0xff pattern:$0x75316420]
    %vm46 = vcmask 1043456
    %v47 = vsel %vm46, %v36, 0.0
    %v48 = vrot.slane %v47, 4
    %v49 = vadd.f32 %v47, %v48
    %v50 = vrot.slane %v49, 2
    %v51 = vadd.f32 %v49, %v50
    %v52 = vrot.slane %v51, 1
    %v53 = vadd.f32 %v51, %v52
    %v54 = vsel %vm46, %v37, 0.0
    %v55 = vrot.slane %v54, 4
    %v56 = vadd.f32 %v54, %v55
    %v57 = vrot.slane %v56, 2
    %v58 = vadd.f32 %v56, %v57
    %v59 = vrot.slane %v58, 1
    %v60 = vadd.f32 %v58, %v59
    %v61 = vsel %vm46, %v40, 0.0
    %v62 = vrot.slane %v61, 4
    %v63 = vadd.f32 %v61, %v62
    %v64 = vrot.slane %v63, 2
    %v65 = vadd.f32 %v63, %v64
    %v66 = vrot.slane %v65, 1
    %v67 = vadd.f32 %v65, %v66
    %v68 = vsel %vm46, %v41, 0.0
    %v69 = vrot.slane %v68, 4
    %v70 = vadd.f32 %v68, %v69
    %v71 = vrot.slane %v70, 2
    %v72 = vadd.f32 %v70, %v71
    %v73 = vrot.slane %v72, 1
    %v74 = vadd.f32 %v72, %v73
    %v75 = vmul.f32 %v53, 0.25
    %v76 = vmul.f32 %v60, 0.25
    %v77 = vmul.f32 %v67, 0.25
    %v78 = vmul.f32 %v74, 0.25
    %v83 = vrot.slane %v76, 4
    %v84 = vrot.slane %v78, 4
    %v85 = vsel %vm46, %v75, %v83
    %v86 = vsel %vm46, %v77, %v84
    %v89 = vsub.f32 %v31, %v85
    %v90 = vsub.f32 %v32, %v86
    %v91 = vmul.f32 %v89, %v89
    %v92 = vmul.f32 %v90, %v90
    %95 = vst [vmem:[#allocation1] ss:$2 sm:$0xff] %v91
    %v96 = vld.sshfl [vmem:[#allocation1] sm:$0xff pattern:$0x75316420]
    %v97 = vld.sshfl [vmem:[#allocation1 + $0x8] sm:$0xff pattern:$0x75316420]
    %s98 = scalar_lea.vmem [#allocation1], 16
    %99 = vst [vmem:[%s98] ss:$2 sm:$0xff] %v92
    %v100 = vld.sshfl [vmem:[#allocation1 + $0x10] sm:$0xff pattern:$0x75316420]
    %v101 = vld.sshfl [vmem:[#allocation1 + $0x18] sm:$0xff pattern:$0x75316420]
    %v106 = vsel %vm46, %v96, 0.0
    %v107 = vrot.slane %v106, 4
    %v108 = vadd.f32 %v106, %v107
    %v109 = vrot.slane %v108, 2
    %v110 = vadd.f32 %v108, %v109
    %v111 = vrot.slane %v110, 1
    %v112 = vadd.f32 %v110, %v111
    %v113 = vsel %vm46, %v97, 0.0
    %v114 = vrot.slane %v113, 4
    %v115 = vadd.f32 %v113, %v114
    %v116 = vrot.slane %v115, 2
    %v117 = vadd.f32 %v115, %v116
    %v118 = vrot.slane %v117, 1
    %v119 = vadd.f32 %v117, %v118
    %v120 = vsel %vm46, %v100, 0.0
    %v121 = vrot.slane %v120, 4
    %v122 = vadd.f32 %v120, %v121
    %v123 = vrot.slane %v122, 2
    %v124 = vadd.f32 %v122, %v123
    %v125 = vrot.slane %v124, 1
    %v126 = vadd.f32 %v124, %v125
    %v127 = vsel %vm46, %v101, 0.0
    %v128 = vrot.slane %v127, 4
    %v129 = vadd.f32 %v127, %v128
    %v130 = vrot.slane %v129, 2
    %v131 = vadd.f32 %v129, %v130
    %v132 = vrot.slane %v131, 1
    %v133 = vadd.f32 %v131, %v132
    %v134 = vmul.f32 %v112, 0.25
    %v135 = vmul.f32 %v119, 0.25
    %v136 = vmul.f32 %v126, 0.25
    %v137 = vmul.f32 %v133, 0.25
    %v138 = vadd.f32 %v134, 1e-05
    %v139 = vadd.f32 %v135, 1e-05
    %v140 = vadd.f32 %v136, 1e-05
    %v141 = vadd.f32 %v137, 1e-05
    %v142 = vrsqrt.pop %v138
    %v143 = vmul.f32 %v142, %v138
    %v144 = vmul.f32 %v143, %v142
    %v145 = vmul.f32 0.5, %v144
    %v146 = vsub.f32 1.5, %v145
    %v147 = vmul.f32 %v142, %v146
    %vm148 = vweird.f32 %v138
    %vm149 = vweird.f32 %v142
    %vm150 = vmor %vm148, %vm149
    %v151 = vsel %vm150, %v142, %v147
    %v152 = vrsqrt.pop %v139
    %v153 = vmul.f32 %v152, %v139
    %v154 = vmul.f32 %v153, %v152
    %v155 = vmul.f32 0.5, %v154
    %v156 = vsub.f32 1.5, %v155
    %v157 = vmul.f32 %v152, %v156
    %vm158 = vweird.f32 %v139
    %vm159 = vweird.f32 %v152
    %vm160 = vmor %vm158, %vm159
    %v161 = vsel %vm160, %v152, %v157
    %v162 = vrsqrt.pop %v140
    %v163 = vmul.f32 %v162, %v140
    %v164 = vmul.f32 %v163, %v162
    %v165 = vmul.f32 0.5, %v164
    %v166 = vsub.f32 1.5, %v165
    %v167 = vmul.f32 %v162, %v166
    %vm168 = vweird.f32 %v140
    %vm169 = vweird.f32 %v162
    %vm170 = vmor %vm168, %vm169
    %v171 = vsel %vm170, %v162, %v167
    %v172 = vrsqrt.pop %v141
    %v173 = vmul.f32 %v172, %v141
    %v174 = vmul.f32 %v173, %v172
    %v175 = vmul.f32 0.5, %v174
    %v176 = vsub.f32 1.5, %v175
    %v177 = vmul.f32 %v172, %v176
    %vm178 = vweird.f32 %v141
    %vm179 = vweird.f32 %v172
    %vm180 = vmor %vm178, %vm179
    %v181 = vsel %vm180, %v172, %v177
    %v186 = vrot.slane %v161, 4
    %v187 = vrot.slane %v181, 4
    %v188 = vsel %vm46, %v151, %v186
    %v189 = vsel %vm46, %v171, %v187
    %v192 = vmul.f32 %v89, %v188
    %v193 = vmul.f32 %v90, %v189
    %v194 = vld [vmem:[%s1] sm:$0xf]
    %196 = vset.pattern.permute.xlu0 0
    %197 = vperm.xlu0 %196, %v194
    %v198 = vpop.permute.xlu0 %197
    %v200 = vunpack.c.l.s4 839922192
    %v201 = vunpack.c.0.s8 %v200
    %v202 = vperm.slane %v198, %v201
    %v204 = vmul.f32 %v192, %v202
    %v205 = vmul.f32 %v193, %v202
    %v206 = vld [vmem:[%s2] sm:$0xf]
    %208 = vset.pattern.permute.xlu0 0
    %209 = vperm.xlu0 %208, %v206
    %v210 = vpop.permute.xlu0 %209
    %v212 = vunpack.c.l.s4 839922192
    %v213 = vunpack.c.0.s8 %v212
    %v214 = vperm.slane %v210, %v213
    %v216 = vadd.f32 %v204, %v214
    %v217 = vadd.f32 %v205, %v214
    %218 = vst [vmem:[#allocation5] sm:$0xff] %v216
    %219 = vst [vmem:[#allocation5 + $0x8] sm:$0xff] %v217
    // Predicated region
    $region18: #{tpu_custom_call.1} parent=1 // pred_check
      _
    $region19: #{tpu_custom_call.1} parent=1 // pred_check_branch
      %221 = sbr.rel (0) target = $region21
    $region20: #{tpu_custom_call.1} parent=1 // pred_region
      %223 = vsyncadd [#allocation4], 0
      %s224 = sshll.u32 [#allocation5], 4
      %s225 = int_to_ptr.vmem [resolvable:$true] %s224
      %s226 = sshll.u32 %s3, 4
      %s227 = int_to_ptr.hbm [resolvable:$true] %s226
      %232 = dma.vmem_to_hbm [thread:$0]  %s225, 256, %s227, [#allocation4], 128, 128, 8
    $region21: #{tpu_custom_call.1} parent=1 // pred_fallthru
      _
    // Predicated region
    $region22: #{tpu_custom_call.1} parent=1 // pred_check
      _
    $region23: #{tpu_custom_call.1} parent=1 // pred_check_branch
      %234 = sbr.rel (0) target = $region25
    $region24: #{tpu_custom_call.1} parent=1 // pred_region
      %236 = dma.done [#allocation4], 256
    $region25: #{tpu_custom_call.1} parent=1 // pred_fallthru
      _
    %237 = vsyncpa [#allocation3], 1
    %238 = vsyncpa [#allocation4], 1

</llo_original>
